<compile_context>
chip_gen: v6e
topology: v6e:2x2x1
jax: 0.10.0
libtpu: 0.0.40
codegen_flags: <defaults>
</compile_context>

<pallas_src>
import math
import jax
import jax.numpy as jnp
from jax import lax
from jax.experimental import pallas as pl
from jax.experimental.pallas import tpu as pltpu

EMBED_DIM = 512       # per-modality embedding size (concat -> 1024)
PROJ_IN = 1024        # project_layer = nn.Linear(1024, 512)
PROJ_OUT = 512
NORM_EPS = 1e-12      # F.normalize default eps
WEIGHT_DTYPE = jnp.bfloat16
DEFAULT_TILE_B = 256  # batch tile; fits v7x's 64 MiB VMEM with double-buffering


# ----------------------------- kernels ------------------------------------ #

def _l2norm_rows(y):
    """x / max(||x||, eps) along last dim, via rsqrt (EUP)."""
    ss = jnp.sum(y * y, axis=-1, keepdims=True)
    inv = lax.rsqrt(jnp.maximum(ss, NORM_EPS * NORM_EPS))
    return y * inv


def _linear_norm_kernel(x_ref, w_ref, b_ref, o_ref):
    """o = l2_normalize(x @ W + b, axis=-1) — fused encoder linear + F.normalize."""
    x = x_ref[...].astype(w_ref.dtype)
    y = jnp.dot(x, w_ref[...], preferred_element_type=jnp.float32)
    y = y + b_ref[...].astype(jnp.float32)
    o_ref[...] = _l2norm_rows(y).astype(o_ref.dtype)


def _img_cap_proj_norm_kernel(img_ref, cap_ref,
                              wimg_ref, bimg_ref,
                              wtxt_ref, btxt_ref,
                              wtop_ref, wbot_ref, bproj_ref,
                              o_ref):
    """Fused: img/cap encoders -> (virtual concat) -> project_layer -> normalize.

    concat([e_img, e_cap], -1) @ proj_W == e_img @ W_top + e_cap @ W_bot,
    so no [B,1024] activation is ever materialized in HBM.
    """
    img = img_ref[...].astype(wimg_ref.dtype)
    cap = cap_ref[...].astype(wtxt_ref.dtype)

    emb_img = jnp.dot(img, wimg_ref[...], preferred_element_type=jnp.float32)
    emb_img = emb_img + bimg_ref[...].astype(jnp.float32)
    emb_cap = jnp.dot(cap, wtxt_ref[...], preferred_element_type=jnp.float32)
    emb_cap = emb_cap + btxt_ref[...].astype(jnp.float32)

    y = jnp.dot(emb_img.astype(wtop_ref.dtype), wtop_ref[...],
                preferred_element_type=jnp.float32)
    y = y + jnp.dot(emb_cap.astype(wbot_ref.dtype), wbot_ref[...],
                    preferred_element_type=jnp.float32)
    y = y + bproj_ref[...].astype(jnp.float32)

    o_ref[...] = _l2norm_rows(y).astype(o_ref.dtype)


# ----------------------------- wrappers ------------------------------------ #

def _row_tiled_spec(tb, d):
    """Activation / output spec: tiled over batch, full feature dim."""
    return pl.BlockSpec((tb, d), lambda i: (i, 0))


def _resident_spec(shape):
    """Weight / bias spec: same block for every batch tile (stays in VMEM)."""
    return pl.BlockSpec(shape, lambda i: (0, 0))


def _compiler_params():
    return pltpu.CompilerParams(dimension_semantics=("parallel",))


def pallas_linear_normalize(x, w, b, tile_b=DEFAULT_TILE_B):
    """l2_normalize(x @ W + b) in a single kernel, batch-tiled."""
    B, Din = x.shape
    Dout = w.shape[1]
    tb = min(tile_b, B)
    grid = (pl.cdiv(B, tb),)

    cost = pl.CostEstimate(
        flops=2 * B * Din * Dout,
        transcendentals=B,
        bytes_accessed=(x.size * x.dtype.itemsize
                        + w.size * w.dtype.itemsize
                        + b.size * b.dtype.itemsize
                        + B * Dout * x.dtype.itemsize),
    )

    return pl.pallas_call(
        _linear_norm_kernel,
        out_shape=jax.ShapeDtypeStruct((B, Dout), x.dtype),
        grid=grid,
        in_specs=[_row_tiled_spec(tb, Din),
                  _resident_spec((Din, Dout)),
                  _resident_spec((1, Dout))],
        out_specs=_row_tiled_spec(tb, Dout),
        compiler_params=_compiler_params(),
        cost_estimate=cost,
    )(x, w, b)


def pallas_img_cap_project_normalize(image, captions,
                                     img_w, img_b, txt_w, txt_b,
                                     proj_w_top, proj_w_bot, proj_b,
                                     tile_b=DEFAULT_TILE_B):
    """Fused image+captions path: 1 pallas_call, no concat, no HBM round-trips."""
    B, Dimg = image.shape
    _, Dtxt = captions.shape
    E = img_w.shape[1]
    Dout = proj_w_top.shape[1]
    tb = min(tile_b, B)
    grid = (pl.cdiv(B, tb),)

    weight_bytes = sum(a.size * a.dtype.itemsize
                       for a in (img_w, img_b, txt_w, txt_b,
                                 proj_w_top, proj_w_bot, proj_b))
    cost = pl.CostEstimate(
        flops=2 * B * (Dimg * E + Dtxt * E + 2 * E * Dout),
        transcendentals=B,
        bytes_accessed=(image.size * image.dtype.itemsize
                        + captions.size * captions.dtype.itemsize
                        + weight_bytes
                        + B * Dout * image.dtype.itemsize),
    )

    return pl.pallas_call(
        _img_cap_proj_norm_kernel,
        out_shape=jax.ShapeDtypeStruct((B, Dout), image.dtype),
        grid=grid,
        in_specs=[_row_tiled_spec(tb, Dimg),          # image
                  _row_tiled_spec(tb, Dtxt),          # captions
                  _resident_spec((Dimg, E)),          # img_w
                  _resident_spec((1, E)),             # img_b
                  _resident_spec((Dtxt, E)),          # txt_w
                  _resident_spec((1, E)),             # txt_b
                  _resident_spec((E, Dout)),          # proj_w_top (rows 0:512)
                  _resident_spec((E, Dout)),          # proj_w_bot (rows 512:1024)
                  _resident_spec((1, Dout))],         # proj_b
        out_specs=_row_tiled_spec(tb, Dout),
        compiler_params=_compiler_params(),
        cost_estimate=cost,
    )(image, captions, img_w, img_b, txt_w, txt_b,
      proj_w_top, proj_w_bot, proj_b)


# ----------------------- parameter construction ---------------------------- #

def init_params(key, text_dim, image_dim):
    ks = jax.random.split(key, 6)

    def lin(kw, kb, din, dout):
        scale = 1.0 / math.sqrt(din)
        w = jax.random.uniform(kw, (din, dout), jnp.float32, -scale, scale)
        b = jax.random.uniform(kb, (1, dout), jnp.float32, -scale, scale)
        return w, b

    txt_w, txt_b = lin(ks[0], ks[1], text_dim, EMBED_DIM)    # synthetic text encoder
    img_w, img_b = lin(ks[2], ks[3], image_dim, EMBED_DIM)   # synthetic image encoder
    proj_w, proj_b = lin(ks[4], ks[5], PROJ_IN, PROJ_OUT)    # nn.Linear(1024, 512)

    # bf16 weights (halves weight HBM traffic, native MXU dtype); biases stay f32.
    # proj_w pre-split so the fused kernel absorbs the concat as two MXU accumulates.
    params = dict(
        txt_w=txt_w.astype(WEIGHT_DTYPE), txt_b=txt_b,
        img_w=img_w.astype(WEIGHT_DTYPE), img_b=img_b,
        proj_w_top=proj_w[:EMBED_DIM].astype(WEIGHT_DTYPE),
        proj_w_bot=proj_w[EMBED_DIM:].astype(WEIGHT_DTYPE),
        proj_b=proj_b,
        # logit_scale carried by the module but unused in forward().
        logit_scale=jnp.array(math.log(1.0 / 0.07), jnp.float32),
    )
    return params


# ------------------------------ forward ------------------------------------ #

def encoder_model_forward(params, text=None, image=None, captions=None):
    """Mirrors encoder_model.forward semantics; each path is one pallas_call."""
    if text is not None:
        return pallas_linear_normalize(text, params["txt_w"], params["txt_b"])
    elif image is not None:
        if captions is not None:
            return pallas_img_cap_project_normalize(
                image, captions,
                params["img_w"], params["img_b"],
                params["txt_w"], params["txt_b"],
                params["proj_w_top"], params["proj_w_bot"], params["proj_b"])
        return pallas_linear_normalize(image, params["img_w"], params["img_b"])
    else:
        raise ValueError("error!")


# -------------------------------- main -------------------------------------- #

if __name__ == "__main__":
    B = 8
    TEXT_DIM = 128    # synthetic text feature dim
    IMAGE_DIM = 128   # synthetic image feature dim

    key = jax.random.PRNGKey(0)
    kp, kt, ki, kc = jax.random.split(key, 4)
    params = init_params(kp, TEXT_DIM, IMAGE_DIM)

    text = jax.random.normal(kt, (B, TEXT_DIM), jnp.float32)
    image = jax.random.normal(ki, (B, IMAGE_DIM), jnp.float32)
    captions = jax.random.normal(kc, (B, TEXT_DIM), jnp.float32)

    # path 1: text only -> encoder + normalize (single fused kernel)
    emb_text = encoder_model_forward(params, text=text)
    # path 2: image only -> encoder + normalize (single fused kernel)
    emb_image = encoder_model_forward(params, image=image)
    # path 3: image + captions -> encoders + project(1024->512) + normalize (one kernel)
    emb_img_cap = encoder_model_forward(params, image=image, captions=captions)

    jax.block_until_ready(emb_text)
    jax.block_until_ready(emb_image)
    jax.block_until_ready(emb_img_cap)

    assert emb_text.shape == (B, EMBED_DIM)
    assert emb_image.shape == (B, EMBED_DIM)
    assert emb_img_cap.shape == (B, PROJ_OUT)
    # embeddings must be unit-norm along the last dim
    n1 = jnp.linalg.norm(emb_text, axis=-1)
    n2 = jnp.linalg.norm(emb_image, axis=-1)
    n3 = jnp.linalg.norm(emb_img_cap, axis=-1)
    assert jnp.allclose(n1, 1.0, atol=1e-4)
    assert jnp.allclose(n2, 1.0, atol=1e-4)
    assert jnp.allclose(n3, 1.0, atol=1e-4)

    print("KERNEL_OK")
</pallas_src>

<mosaic_0001>
module attributes {stable_mosaic.version = 11 : i64} {
  func.func @_linear_norm_kernel(%arg0: i32, %arg1: memref<8x128xf32, #tpu.memory_space<vmem>>, %arg2: memref<128x512xbf16, #tpu.memory_space<vmem>>, %arg3: memref<1x512xf32, #tpu.memory_space<vmem>>, %arg4: memref<8x512xf32, #tpu.memory_space<vmem>>) attributes {dimension_semantics = [#tpu.dimension_semantics<parallel>], iteration_bounds = array<i64: 1>, scalar_prefetch = 0 : i64, scratch_operands = 0 : i64, tpu.core_type = #tpu.core_type<tc>, window_params = [{transform_indices = @transform_0, window_bounds = array<i64: 8, 128>}, {pipeline_mode = #tpu.pipeline_mode<synchronous>, transform_indices = @transform_1, window_bounds = array<i64: 128, 512>}, {pipeline_mode = #tpu.pipeline_mode<synchronous>, transform_indices = @transform_2, window_bounds = array<i64: 1, 512>}, {transform_indices = @transform_3, window_bounds = array<i64: 8, 512>}]} {
    %c0 = arith.constant 0 : index
    %c0_0 = arith.constant 0 : index
    %0 = vector.load %arg1[%c0, %c0_0] : memref<8x128xf32, #tpu.memory_space<vmem>>, vector<8x128xf32>
    %1 = arith.truncf %0 : vector<8x128xf32> to vector<8x128xbf16>
    %c0_1 = arith.constant 0 : index
    %c0_2 = arith.constant 0 : index
    %2 = vector.load %arg2[%c0_1, %c0_2] : memref<128x512xbf16, #tpu.memory_space<vmem>>, vector<128x512xbf16>
    %cst = arith.constant dense<0.000000e+00> : vector<8x512xf32>
    %3 = tpu.matmul %1, %2, %cst {dimension_numbers = #tpu.dot_dimension_numbers<[1], [0], [0], [1], [0, 0, 1, 1], [], []>} : vector<8x128xbf16>, vector<128x512xbf16>, vector<8x512xf32> -> vector<8x512xf32>
    %c0_3 = arith.constant 0 : index
    %c0_4 = arith.constant 0 : index
    %4 = vector.load %arg3[%c0_3, %c0_4] : memref<1x512xf32, #tpu.memory_space<vmem>>, vector<1x512xf32>
    %5 = vector.broadcast %4 : vector<1x512xf32> to vector<8x512xf32>
    %6 = arith.addf %3, %5 : vector<8x512xf32>
    %7 = arith.mulf %6, %6 : vector<8x512xf32>
    %cst_5 = arith.constant dense<0.000000e+00> : vector<8xf32>
    %8 = vector.multi_reduction <add>, %7, %cst_5 [1] : vector<8x512xf32> to vector<8xf32>
    %9 = vector.shape_cast %8 : vector<8xf32> to vector<8x1xf32>
    %cst_6 = arith.constant 1.000000e-24 : f32
    %10 = vector.broadcast %cst_6 : f32 to vector<8x1xf32>
    %11 = arith.maximumf %9, %10 : vector<8x1xf32>
    %12 = math.rsqrt %11 : vector<8x1xf32>
    %13 = vector.broadcast %12 : vector<8x1xf32> to vector<8x512xf32>
    %14 = arith.mulf %6, %13 : vector<8x512xf32>
    %c0_7 = arith.constant 0 : index
    %c0_8 = arith.constant 0 : index
    %15 = vector.load %arg4[%c0_7, %c0_8] : memref<8x512xf32, #tpu.memory_space<vmem>>, vector<8x512xf32>
    tpu.vector_store %arg4[%c0_7, %c0_8], %14 {strides = array<i32>} : memref<8x512xf32, #tpu.memory_space<vmem>>, vector<8x512xf32>,
    return
  }
  func.func @transform_0(%arg0: i32) -> (i32, i32) {
    %c0_i32 = arith.constant 0 : i32
    %c0_i32_0 = arith.constant 0 : i32
    return %arg0, %c0_i32 : i32, i32
  }
  func.func @transform_1(%arg0: i32) -> (i32, i32) {
    %c0_i32 = arith.constant 0 : i32
    %c0_i32_0 = arith.constant 0 : i32
    %c0_i32_1 = arith.constant 0 : i32
    return %c0_i32, %c0_i32_0 : i32, i32
  }
  func.func @transform_2(%arg0: i32) -> (i32, i32) {
    %c0_i32 = arith.constant 0 : i32
    %c0_i32_0 = arith.constant 0 : i32
    %c0_i32_1 = arith.constant 0 : i32
    return %c0_i32, %c0_i32_0 : i32, i32
  }
  func.func @transform_3(%arg0: i32) -> (i32, i32) {
    %c0_i32 = arith.constant 0 : i32
    %c0_i32_0 = arith.constant 0 : i32
    return %arg0, %c0_i32 : i32, i32
  }
}

</mosaic_0001>

<llo_original>
// kernel: tpu_custom_call.1
$region0: #{tpu_custom_call.1}
  #allocation0 [shape = 'u32[]', space=smem, size = 0x4, offset = 0x4, fixed_abs, tag = 'smem constant byte address 0x4 - core index']
  #allocation1 [shape = 'u32[144,128]{1,0:T(1,128)}', space=vmem, size = 0x12000, scoped, tag = 'internal scratch']
  %s0 = inlined_call_operand.hbm [shape: f32[8,128], index: 0, kind: input, shape index: {}]
  %s1 = inlined_call_operand.hbm [shape: bf16[128,512], index: 1, kind: input, shape index: {}]
  %s2 = inlined_call_operand.hbm [shape: f32[1,512], index: 2, kind: input, shape index: {}]
  %s3 = inlined_call_operand.hbm [shape: f32[8,512], index: 3, kind: output, shape index: {}]
  %s4 = sld [smem:[#allocation0]]
  $region34: #{tpu_custom_call.1} parent=0
    _
  %s6 = ssub.s32 1, %s4
  %s7 = scalar_select 0, %s6, %s4
  $region1: #{tpu_custom_call.1} parent=0
    #allocation2 [shape = 'u8[4096]{0}', space=vmem, size = 0x1000, scoped, tag = 'input window, operand 0, single buffered']
    #allocation3 [shape = 's32[1]{0}', space=sflag, size = 0x4, scoped, tag = 'scoped memory for tpu_custom_call.1']
    #allocation4 [shape = 's32[1]{0}', space=sflag, size = 0x4, scoped, tag = 'scoped memory for tpu_custom_call.1']
    #allocation5 [shape = 'u8[131072]{0}', space=vmem, size = 0x20000, scoped, tag = 'input window, operand 1, single buffered']
    #allocation6 [shape = 's32[1]{0}', space=sflag, size = 0x4, scoped, tag = 'scoped memory for tpu_custom_call.1']
    #allocation7 [shape = 'u8[2048]{0}', space=vmem, size = 0x800, scoped, tag = 'input window, operand 2, single buffered']
    #allocation8 [shape = 'u8[16384]{0}', space=vmem, size = 0x4000, scoped, tag = 'output window, operand 0, single buffered']
    %8 = vsyncpa [#allocation3], 0
    %9 = vsyncpa [#allocation6], 0
    %10 = vsyncpa [#allocation4], 0
    // Predicated region
    $region2: #{tpu_custom_call.1} parent=1 // pred_check
      _
    $region3: #{tpu_custom_call.1} parent=1 // pred_check_branch
      %12 = sbr.rel (0) target = $region5
    $region4: #{tpu_custom_call.1} parent=1 // pred_region
      %s14 = ssub.s32 128, 128
      %15 = vsyncadd [#allocation3], %s14
      %s17 = sshll.u32 [#allocation2], 4
      %s18 = int_to_ptr.vmem [resolvable:$true] %s17
      %20 = dma.hbm_to_vmem [thread:$0]  %s0, 128, %s18, [#allocation3]
    $region5: #{tpu_custom_call.1} parent=1 // pred_fallthru
      _
    // Predicated region
    $region6: #{tpu_custom_call.1} parent=1 // pred_check
      _
    $region7: #{tpu_custom_call.1} parent=1 // pred_check_branch
      %22 = sbr.rel (0) target = $region9
    $region8: #{tpu_custom_call.1} parent=1 // pred_region
      %s24 = ssub.s32 4096, 4096
      %25 = vsyncadd [#allocation6], %s24
      %s26 = sshll.u32 [#allocation5], 4
      %s27 = int_to_ptr.vmem [resolvable:$true] %s26
      %32 = dma.hbm_to_vmem [thread:$0]  %s1, 4096, %s27, [#allocation6], 256, 256, 16
    $region9: #{tpu_custom_call.1} parent=1 // pred_fallthru
      _
    // Predicated region
    $region10: #{tpu_custom_call.1} parent=1 // pred_check
      _
    $region11: #{tpu_custom_call.1} parent=1 // pred_check_branch
      %34 = sbr.rel (0) target = $region13
    $region12: #{tpu_custom_call.1} parent=1 // pred_region
      %s36 = ssub.s32 64, 64
      %37 = vsyncadd [#allocation6], %s36
      %s39 = sshll.u32 [#allocation7], 4
      %s40 = int_to_ptr.vmem [resolvable:$true] %s39
      %42 = dma.hbm_to_vmem [thread:$0]  %s2, 64, %s40, [#allocation6]
    $region13: #{tpu_custom_call.1} parent=1 // pred_fallthru
      _
    // Predicated region
    $region14: #{tpu_custom_call.1} parent=1 // pred_check
      _
    $region15: #{tpu_custom_call.1} parent=1 // pred_check_branch
      %44 = sbr.rel (0) target = $region17
    $region16: #{tpu_custom_call.1} parent=1 // pred_region
      %45 = dma.done [#allocation3], 128
    $region17: #{tpu_custom_call.1} parent=1 // pred_fallthru
      _
    // Predicated region
    $region18: #{tpu_custom_call.1} parent=1 // pred_check
      _
    $region19: #{tpu_custom_call.1} parent=1 // pred_check_branch
      %47 = sbr.rel (0) target = $region21
    $region20: #{tpu_custom_call.1} parent=1 // pred_region
      %48 = dma.done [#allocation6], 4096
    $region21: #{tpu_custom_call.1} parent=1 // pred_fallthru
      _
    // Predicated region
    $region22: #{tpu_custom_call.1} parent=1 // pred_check
      _
    $region23: #{tpu_custom_call.1} parent=1 // pred_check_branch
      %50 = sbr.rel (0) target = $region25
    $region24: #{tpu_custom_call.1} parent=1 // pred_region
      %51 = dma.done [#allocation6], 64
    $region25: #{tpu_custom_call.1} parent=1 // pred_fallthru
      _
    %v53 = vld [vmem:[#allocation2] sm:$0xff]
    %v54 = vpack.c.bf16 %v53, %v53
    %v55 = vld [vmem:[#allocation5] sm:$0xff]
    %v56 = vld [vmem:[#allocation5 + $0x8] sm:$0xff]
    %v57 = vld [vmem:[#allocation5 + $0x10] sm:$0xff]
    %v58 = vld [vmem:[#allocation5 + $0x18] sm:$0xff]
    %v59 = vld [vmem:[#allocation5 + $0x20] sm:$0xff]
    %v60 = vld [vmem:[#allocation5 + $0x28] sm:$0xff]
    %v61 = vld [vmem:[#allocation5 + $0x30] sm:$0xff]
    %v62 = vld [vmem:[#allocation5 + $0x38] sm:$0xff]
    %v63 = vld [vmem:[#allocation5 + $0x40] sm:$0xff]
    %v64 = vld [vmem:[#allocation5 + $0x48] sm:$0xff]
    %v65 = vld [vmem:[#allocation5 + $0x50] sm:$0xff]
    %v66 = vld [vmem:[#allocation5 + $0x58] sm:$0xff]
    %v67 = vld [vmem:[#allocation5 + $0x60] sm:$0xff]
    %v68 = vld [vmem:[#allocation5 + $0x68] sm:$0xff]
    %v69 = vld [vmem:[#allocation5 + $0x70] sm:$0xff]
    %v70 = vld [vmem:[#allocation5 + $0x78] sm:$0xff]
    %v71 = vld [vmem:[#allocation5 + $0x80] sm:$0xff]
    %v72 = vld [vmem:[#allocation5 + $0x88] sm:$0xff]
    %v73 = vld [vmem:[#allocation5 + $0x90] sm:$0xff]
    %v74 = vld [vmem:[#allocation5 + $0x98] sm:$0xff]
    %v75 = vld [vmem:[#allocation5 + $0xa0] sm:$0xff]
    %v76 = vld [vmem:[#allocation5 + $0xa8] sm:$0xff]
    %v77 = vld [vmem:[#allocation5 + $0xb0] sm:$0xff]
    %v78 = vld [vmem:[#allocation5 + $0xb8] sm:$0xff]
    %v79 = vld [vmem:[#allocation5 + $0xc0] sm:$0xff]
    %v80 = vld [vmem:[#allocation5 + $0xc8] sm:$0xff]
    %v81 = vld [vmem:[#allocation5 + $0xd0] sm:$0xff]
    %v82 = vld [vmem:[#allocation5 + $0xd8] sm:$0xff]
    %v83 = vld [vmem:[#allocation5 + $0xe0] sm:$0xff]
    %v84 = vld [vmem:[#allocation5 + $0xe8] sm:$0xff]
    %v85 = vld [vmem:[#allocation5 + $0xf0] sm:$0xff]
    %v86 = vld [vmem:[#allocation5 + $0xf8] sm:$0xff]
    %v87 = vld [vmem:[#allocation7] sm:$0xf]
    %v89 = vlaneseq
    %v90 = vshrl.u32 %v89, 7
    %v91 = vsub.s32 0, %v90
    %v92 = vrot.slane %v87, %v91
    %v93 = vlaneseq
    %v94 = vshrl.u32 %v93, 7
    %v95 = vsub.s32 1, %v94
    %v96 = vrot.slane %v87, %v95
    %v97 = vlaneseq
    %v98 = vshrl.u32 %v97, 7
    %v99 = vsub.s32 2, %v98
    %v100 = vrot.slane %v87, %v99
    %v101 = vlaneseq
    %v102 = vshrl.u32 %v101, 7
    %v103 = vsub.s32 3, %v102
    %v104 = vrot.slane %v87, %v103
    %v141 = vunpack.c.l.b16 %v55
    %v142 = vunpack.c.h.b16 %v55
    %v143 = vunpack.c.l.b16 %v56
    %v144 = vunpack.c.h.b16 %v56
    %v145 = vunpack.c.l.b16 %v57
    %v146 = vunpack.c.h.b16 %v57
    %v147 = vunpack.c.l.b16 %v58
    %v148 = vunpack.c.h.b16 %v58
    %v149 = vunpack.c.l.b16 %v59
    %v150 = vunpack.c.h.b16 %v59
    %v151 = vunpack.c.l.b16 %v60
    %v152 = vunpack.c.h.b16 %v60
    %v153 = vunpack.c.l.b16 %v61
    %v154 = vunpack.c.h.b16 %v61
    %v155 = vunpack.c.l.b16 %v62
    %v156 = vunpack.c.h.b16 %v62
    %v157 = vunpack.c.l.b16 %v63
    %v158 = vunpack.c.h.b16 %v63
    %v159 = vunpack.c.l.b16 %v64
    %v160 = vunpack.c.h.b16 %v64
    %v161 = vunpack.c.l.b16 %v65
    %v162 = vunpack.c.h.b16 %v65
    %v163 = vunpack.c.l.b16 %v66
    %v164 = vunpack.c.h.b16 %v66
    %v165 = vunpack.c.l.b16 %v67
    %v166 = vunpack.c.h.b16 %v67
    %v167 = vunpack.c.l.b16 %v68
    %v168 = vunpack.c.h.b16 %v68
    %v169 = vunpack.c.l.b16 %v69
    %v170 = vunpack.c.h.b16 %v69
    %v171 = vunpack.c.l.b16 %v70
    %v172 = vunpack.c.h.b16 %v70
    %v173 = vunpack.c.l.b16 %v71
    %v174 = vunpack.c.h.b16 %v71
    %v175 = vunpack.c.l.b16 %v72
    %v176 = vunpack.c.h.b16 %v72
    %v177 = vunpack.c.l.b16 %v73
    %v178 = vunpack.c.h.b16 %v73
    %v179 = vunpack.c.l.b16 %v74
    %v180 = vunpack.c.h.b16 %v74
    %v181 = vunpack.c.l.b16 %v75
    %v182 = vunpack.c.h.b16 %v75
    %v183 = vunpack.c.l.b16 %v76
    %v184 = vunpack.c.h.b16 %v76
    %v185 = vunpack.c.l.b16 %v77
    %v186 = vunpack.c.h.b16 %v77
    %v187 = vunpack.c.l.b16 %v78
    %v188 = vunpack.c.h.b16 %v78
    %v189 = vunpack.c.l.b16 %v79
    %v190 = vunpack.c.h.b16 %v79
    %v191 = vunpack.c.l.b16 %v80
    %v192 = vunpack.c.h.b16 %v80
    %v193 = vunpack.c.l.b16 %v81
    %v194 = vunpack.c.h.b16 %v81
    %v195 = vunpack.c.l.b16 %v82
    %v196 = vunpack.c.h.b16 %v82
    %v197 = vunpack.c.l.b16 %v83
    %v198 = vunpack.c.h.b16 %v83
    %v199 = vunpack.c.l.b16 %v84
    %v200 = vunpack.c.h.b16 %v84
    %v201 = vunpack.c.l.b16 %v85
    %v202 = vunpack.c.h.b16 %v85
    %v203 = vunpack.c.l.b16 %v86
    %v204 = vunpack.c.h.b16 %v86
    %v205 = vpack.c.b16 %v145, %v141
    %v206 = vpack.c.b16 %v146, %v142
    %v207 = vpack.c.b16 %v147, %v143
    %v208 = vpack.c.b16 %v148, %v144
    %v209 = vpack.c.b16 %v153, %v149
    %v210 = vpack.c.b16 %v154, %v150
    %v211 = vpack.c.b16 %v155, %v151
    %v212 = vpack.c.b16 %v156, %v152
    %v213 = vpack.c.b16 %v161, %v157
    %v214 = vpack.c.b16 %v162, %v158
    %v215 = vpack.c.b16 %v163, %v159
    %v216 = vpack.c.b16 %v164, %v160
    %v217 = vpack.c.b16 %v169, %v165
    %v218 = vpack.c.b16 %v170, %v166
    %v219 = vpack.c.b16 %v171, %v167
    %v220 = vpack.c.b16 %v172, %v168
    %v221 = vpack.c.b16 %v177, %v173
    %v222 = vpack.c.b16 %v178, %v174
    %v223 = vpack.c.b16 %v179, %v175
    %v224 = vpack.c.b16 %v180, %v176
    %v225 = vpack.c.b16 %v185, %v181
    %v226 = vpack.c.b16 %v186, %v182
    %v227 = vpack.c.b16 %v187, %v183
    %v228 = vpack.c.b16 %v188, %v184
    %v229 = vpack.c.b16 %v193, %v189
    %v230 = vpack.c.b16 %v194, %v190
    %v231 = vpack.c.b16 %v195, %v191
    %v232 = vpack.c.b16 %v196, %v192
    %v233 = vpack.c.b16 %v201, %v197
    %v234 = vpack.c.b16 %v202, %v198
    %v235 = vpack.c.b16 %v203, %v199
    %v236 = vpack.c.b16 %v204, %v200
    %269 = vmatprep.subr.bf16.mxu0 %v234
    %270 = vmatpush1.bf16.msra.mxu0 %v233
    %271 = vmatprep.subr.bf16.mxu0 %v230
    %272 = vmatpush1.bf16.msra.mxu0 %v229
    %273 = vmatprep.subr.bf16.mxu0 %v226
    %274 = vmatpush1.bf16.msra.mxu0 %v225
    %275 = vmatprep.subr.bf16.mxu0 %v222
    %276 = vmatpush1.bf16.msra.mxu0 %v221
    %277 = vmatprep.subr.bf16.mxu0 %v218
    %278 = vmatpush1.bf16.msra.mxu0 %v217
    %279 = vmatprep.subr.bf16.mxu0 %v214
    %280 = vmatpush1.bf16.msra.mxu0 %v213
    %281 = vmatprep.subr.bf16.mxu0 %v210
    %282 = vmatpush1.bf16.msra.mxu0 %v209
    %283 = vmatprep.subr.bf16.mxu0 %v206
    %284 = vmatpush1.bf16.msra.mxu0 %v205
    %285 = vmatprep.subr.bf16.mxu0 0
    %286 = vmatpush2.bf16.msra.mxu0 0
    %287 = vmatprep.subr.bf16.mxu0 0
    %288 = vmatpush2.bf16.msra.mxu0 0
    %289 = vmatprep.subr.bf16.mxu0 0
    %290 = vmatpush2.bf16.msra.mxu0 0
    %291 = vmatprep.subr.bf16.mxu0 0
    %292 = vmatpush2.bf16.msra.mxu0 0
    %293 = vmatprep.subr.bf16.mxu0 0
    %294 = vmatpush2.bf16.msra.mxu0 0
    %295 = vmatprep.subr.bf16.mxu0 0
    %296 = vmatpush2.bf16.msra.mxu0 0
    %297 = vmatprep.subr.bf16.mxu0 0
    %298 = vmatpush2.bf16.msra.mxu0 0
    %299 = vmatprep.subr.bf16.mxu0 0
    %300 = vmatpush2.bf16.msra.mxu0 0
    %301 = vmatprep.mubr.bf16.mxu0 0
    %302 = vmatmul.mubr.bf16.gmra.mxu0 %v54
    %v303 = vpop.f32.mrf.mxu0
    %v304 = vadd.f32 %v92, %v303
    %v305 = vpop.f32.mrf.mxu0
    %v306 = vadd.f32 %v96, %v305
    %v307 = vpop.f32.mrf.mxu0
    %v308 = vpop.f32.mrf.mxu0
    %309 = vdwg.mxu0
    %310 = vmatprep.subr.bf16.mxu0 %v236
    %311 = vmatpush1.bf16.msra.mxu0 %v235
    %312 = vmatprep.subr.bf16.mxu0 %v232
    %313 = vmatpush1.bf16.msra.mxu0 %v231
    %314 = vmatprep.subr.bf16.mxu0 %v228
    %315 = vmatpush1.bf16.msra.mxu0 %v227
    %316 = vmatprep.subr.bf16.mxu0 %v224
    %317 = vmatpush1.bf16.msra.mxu0 %v223
    %318 = vmatprep.subr.bf16.mxu0 %v220
    %319 = vmatpush1.bf16.msra.mxu0 %v219
    %320 = vmatprep.subr.bf16.mxu0 %v216
    %321 = vmatpush1.bf16.msra.mxu0 %v215
    %322 = vmatprep.subr.bf16.mxu0 %v212
    %323 = vmatpush1.bf16.msra.mxu0 %v211
    %324 = vmatprep.subr.bf16.mxu0 %v208
    %325 = vmatpush1.bf16.msra.mxu0 %v207
    %326 = vmatprep.subr.bf16.mxu0 0
    %327 = vmatpush2.bf16.msra.mxu0 0
    %328 = vmatprep.subr.bf16.mxu0 0
    %329 = vmatpush2.bf16.msra.mxu0 0
    %330 = vmatprep.subr.bf16.mxu0 0
    %331 = vmatpush2.bf16.msra.mxu0 0
    %332 = vmatprep.subr.bf16.mxu0 0
    %333 = vmatpush2.bf16.msra.mxu0 0
    %334 = vmatprep.subr.bf16.mxu0 0
    %335 = vmatpush2.bf16.msra.mxu0 0
    %336 = vmatprep.subr.bf16.mxu0 0
    %337 = vmatpush2.bf16.msra.mxu0 0
    %338 = vmatprep.subr.bf16.mxu0 0
    %339 = vmatpush2.bf16.msra.mxu0 0
    %340 = vmatprep.subr.bf16.mxu0 0
    %341 = vmatpush2.bf16.msra.mxu0 0
    %342 = vmatprep.mubr.bf16.mxu0 0
    %343 = vmatmul.mubr.bf16.gmra.mxu0 %v54
    %v344 = vpop.f32.mrf.mxu0
    %v345 = vadd.f32 %v100, %v344
    %v346 = vpop.f32.mrf.mxu0
    %v347 = vadd.f32 %v104, %v346
    %v348 = vpop.f32.mrf.mxu0
    %v349 = vpop.f32.mrf.mxu0
    %350 = vdwg.mxu0
    %v351 = vmul.f32 %v304, %v304
    %v352 = vmul.f32 %v306, %v306
    %v353 = vmul.f32 %v345, %v345
    %v354 = vmul.f32 %v347, %v347
    %v355 = vadd.f32 %v351, %v352
    %v356 = vadd.f32 %v355, %v353
    %v357 = vadd.f32 %v356, %v354
    %358 = vadd.xlane.f32.xlu0 %v357
    %v359 = vpop.xlane.xlu0 %358
    %v360 = vmax.f32 %v359, 1e-24
    %v361 = vrsqrt.pop %v360
    %v362 = vmul.f32 %v304, %v361
    %v363 = vmul.f32 %v306, %v361
    %v364 = vmul.f32 %v345, %v361
    %v365 = vmul.f32 %v347, %v361
    %366 = vst [vmem:[#allocation8] sm:$0xff] %v362
    %367 = vst [vmem:[#allocation8 + $0x8] sm:$0xff] %v363
    %368 = vst [vmem:[#allocation8 + $0x10] sm:$0xff] %v364
    %369 = vst [vmem:[#allocation8 + $0x18] sm:$0xff] %v365
    // Predicated region
    $region26: #{tpu_custom_call.1} parent=1 // pred_check
      _
    $region27: #{tpu_custom_call.1} parent=1 // pred_check_branch
      %371 = sbr.rel (0) target = $region29
    $region28: #{tpu_custom_call.1} parent=1 // pred_region
      %s373 = ssub.s32 512, 512
      %374 = vsyncadd [#allocation4], %s373
      %s376 = sshll.u32 [#allocation8], 4
      %s377 = int_to_ptr.vmem [resolvable:$true] %s376
      %379 = dma.vmem_to_hbm [thread:$0]  %s377, 512, %s3, [#allocation4]
    $region29: #{tpu_custom_call.1} parent=1 // pred_fallthru
      _
    // Predicated region
    $region30: #{tpu_custom_call.1} parent=1 // pred_check
      _
    $region31: #{tpu_custom_call.1} parent=1 // pred_check_branch
      %381 = sbr.rel (0) target = $region33
    $region32: #{tpu_custom_call.1} parent=1 // pred_region
      %382 = dma.done [#allocation4], 512
    $region33: #{tpu_custom_call.1} parent=1 // pred_fallthru
      _
    %383 = vsyncpa [#allocation3], 1
    %384 = vsyncpa [#allocation6], 1
    %385 = vsyncpa [#allocation4], 1

</llo_original>
